<compile_context>
chip_gen: v5e
topology: v5e:2x2
jax: 0.10.0
libtpu: 0.0.40
codegen_flags: <defaults>
</compile_context>

<pallas_src>
import jax
import jax.numpy as jnp
from jax.experimental import pallas as pl
from jax.experimental.pallas import tpu as pltpu


# ----------------------------- Pallas kernel -------------------------------

def ptm_head_kernel(lids_ref, h_ref, sel_ref, wa_ref, ba_ref, wc_ref, bc_ref,
                    out_ref, acc_ref):
    """One grid step: accumulate token sum on the MXU; on last step run the head.

    lids_ref: (L,) SMEM scalar-prefetch (consumed only by the index_maps)
    h_ref   : (b_blk, s_blk, H)  one tile of one selected feature layer (bf16)
    sel_ref : (b_blk, b_blk*s_blk) block-diagonal ones, same dtype as h_ref
    wa_ref  : (H, F_pad)   adaptor weight, pre-transposed, scaled by 1/(L*S), f32
    ba_ref  : (1, F_pad)   adaptor bias (zero-padded lanes), f32
    wc_ref  : (F_pad, O_pad) classifier weight, pre-transposed (zero-padded), f32
    bc_ref  : (1, O_pad)   classifier bias (zero-padded lanes), f32
    out_ref : (b_blk, O_pad) logits (lane-padded; sliced in the wrapper)
    acc_ref : (b_blk, H) f32 scratch — running sum over (L, S)
    """
    del lids_ref  # used only by the index_maps
    l = pl.program_id(1)
    s = pl.program_id(2)

    @pl.when((l == 0) & (s == 0))
    def _():
        acc_ref[...] = jnp.zeros_like(acc_ref)

    bb, sb, hh = h_ref.shape
    # No astype: the MXU widens bf16 natively; accumulation is f32 via
    # preferred_element_type.  The 1/(L*S) mean scale is folded into wa_ref.
    h = h_ref[...].reshape(bb * sb, hh)                      # (b_blk*s_blk, H)
    acc_ref[...] += jnp.dot(sel_ref[...], h,
                            preferred_element_type=jnp.float32)

    @pl.when((l == pl.num_programs(1) - 1) & (s == pl.num_programs(2) - 1))
    def _():
        enc = acc_ref[...]                                   # (b_blk, H) raw sum
        # encoder_adaptor -> dropout (identity at eval) -> ReLU
        # TODO(synk): nn.Dropout(0.5) training-mode masking is not reproduced.
        feat = jnp.dot(enc, wa_ref[...],
                       preferred_element_type=jnp.float32) + ba_ref[...]
        feat = jnp.maximum(feat, 0.0)
        # classifier
        out_ref[...] = (jnp.dot(feat, wc_ref[...],
                                preferred_element_type=jnp.float32)
                        + bc_ref[...]).astype(out_ref.dtype)


# ------------------------------- wrapper ------------------------------------

def ptm_classifier_head(hidden_states, layer_ids, wa, ba, wc, bc,
                        *, b_blk=None, s_blk=None, vmem_limit_bytes=None):
    """Run the PTMClassifier head on the full encoder hidden-state stack.

    hidden_states: (NL, B, S, H)  all encoder hidden states (bf16 recommended)
    layer_ids    : (L,) int32     indices of the selected feature layers
    wa           : (H, F)  encoder_adaptor weight, pre-transposed to (in, out)
    ba           : (F,)    encoder_adaptor bias
    wc           : (F, O)  classifier weight, pre-transposed to (in, out)
    bc           : (O,)    classifier bias
    Returns logits (B, O) float32.
    """
    NL, B, S, H = hidden_states.shape
    L = int(layer_ids.shape[0])
    F = wa.shape[1]
    O = wc.shape[1]

    h_dtype = hidden_states.dtype
    elem = jnp.dtype(h_dtype).itemsize
    sub = {4: 8, 2: 16, 1: 32}.get(elem, 8)      # sublane packing for this dtype

    if b_blk is None:
        # <=8 keeps the O(b_blk^2) block-diag reduction negligible and matches
        # the 128-row MXU; <=B/2 keeps the "parallel" batch axis >=2 blocks so
        # it can shard across both v7x TensorCores.
        cap = max(1, min(8, B // 2))
        b_blk = max(d for d in range(1, cap + 1) if B % d == 0)
    if s_blk is None:
        # Largest aligned divisor of S up to 512 (amortizes per-step overhead).
        target = min(S, 512)
        cands = [d for d in range(1, target + 1) if S % d == 0 and d % sub == 0]
        s_blk = max(cands) if cands else S

    assert B % b_blk == 0 and S % s_blk == 0
    assert b_blk <= 8, (
        "block-diagonal sel reduction is O(b_blk^2); for b_blk>8 switch the "
        "kernel to a plain axis-1 token sum instead of growing b_blk")
    assert s_blk == S or s_blk % sub == 0, (
        f"s_blk must be a multiple of {sub} for dtype {h_dtype} "
        "(sublane packing), or equal to S")
    # (At real scale also keep H a multiple of 128 for lane-dense tiles.)

    LANE = 128
    F_pad = ((F + LANE - 1) // LANE) * LANE
    O_pad = ((O + LANE - 1) // LANE) * LANE

    # Fold the 1/(L*S) mean scale into the adaptor weight; zero-pad lanes.
    inv = 1.0 / float(L * S)
    wa_p = jnp.zeros((H, F_pad), jnp.float32).at[:, :F].set(
        wa.astype(jnp.float32) * inv)
    ba_p = jnp.zeros((1, F_pad), jnp.float32).at[0, :F].set(ba.astype(jnp.float32))
    wc_p = jnp.zeros((F_pad, O_pad), jnp.float32).at[:F, :O].set(
        wc.astype(jnp.float32))
    bc_p = jnp.zeros((1, O_pad), jnp.float32).at[0, :O].set(bc.astype(jnp.float32))

    # Block-diagonal ones: row i sums the s_blk tokens of batch row i (MXU).
    # Same dtype as the hidden tile so the MXU matmul needs no upcast
    # (ones are exact in bf16); accumulation stays f32.
    sel = jnp.kron(jnp.eye(b_blk, dtype=jnp.float32),
                   jnp.ones((1, s_blk), jnp.float32)).astype(h_dtype)

    grid = (B // b_blk, L, S // s_blk)

    # Advisory cost estimate computed from actual element sizes.
    reduce_flops = 2 * L * B * S * H * b_blk          # block-diag sel matmul
    head_flops = 2 * B * H * F_pad + 2 * B * F_pad * O_pad
    cost = pl.CostEstimate(
        flops=reduce_flops + head_flops,
        transcendentals=0,
        bytes_accessed=(L * B * S * H * elem                       # hidden tiles
                        + b_blk * b_blk * s_blk * elem             # sel
                        + (H * F_pad + F_pad + F_pad * O_pad + O_pad) * 4
                        + B * O_pad * 4),
    )

    # Raise the scoped-VMEM limit only when the double-buffered working set
    # would exceed the conservative default (v5e: 16 MiB scoped default).
    tile_bytes = b_blk * s_blk * H * elem
    const_bytes = (b_blk * b_blk * s_blk * elem
                   + (H * F_pad + F_pad + F_pad * O_pad + O_pad) * 4)
    need = 2 * tile_bytes + 2 * const_bytes + b_blk * H * 4 + 2 * b_blk * O_pad * 4
    if vmem_limit_bytes is None and need > (12 << 20):
        vmem_limit_bytes = min(need * 2, 100 << 20)

    # NOTE: sel/wa/ba/wc/bc have constant index_maps; pipeline_mode=pl.Buffered(1)
    # would skip their (redundant) double buffers for a small VMEM saving — left
    # at the default for portability across Pallas versions.
    out_p = pl.pallas_call(
        ptm_head_kernel,
        out_shape=jax.ShapeDtypeStruct((B, O_pad), jnp.float32),
        grid_spec=pltpu.PrefetchScalarGridSpec(
            num_scalar_prefetch=1,
            grid=grid,
            in_specs=[
                # data-dependent layer selection via the prefetched id table
                pl.BlockSpec((pl.Squeezed(), b_blk, s_blk, H),
                             lambda b, l, s, lids: (lids[l], b, s, 0)),
                pl.BlockSpec((b_blk, b_blk * s_blk), lambda b, l, s, lids: (0, 0)),
                pl.BlockSpec((H, F_pad), lambda b, l, s, lids: (0, 0)),
                pl.BlockSpec((1, F_pad), lambda b, l, s, lids: (0, 0)),
                pl.BlockSpec((F_pad, O_pad), lambda b, l, s, lids: (0, 0)),
                pl.BlockSpec((1, O_pad), lambda b, l, s, lids: (0, 0)),
            ],
            out_specs=pl.BlockSpec((b_blk, O_pad), lambda b, l, s, lids: (b, 0)),
            scratch_shapes=[pltpu.VMEM((b_blk, H), jnp.float32)],
        ),
        compiler_params=pltpu.CompilerParams(
            dimension_semantics=("parallel", "arbitrary", "arbitrary"),
            vmem_limit_bytes=vmem_limit_bytes),
        cost_estimate=cost,
    )(layer_ids, hidden_states, sel, wa_p, ba_p, wc_p, bc_p)

    return out_p[:, :O]


# --------------------- synthetic deterministic "encoder" -------------------
# Stand-in for the pretrained transformer (checkpoint unavailable): embedding
# lookup followed by a stack of tanh dense layers.  It returns ALL hidden
# states stacked as (NL+1, B, S, H) in bf16, mirroring output_hidden_states=True
# while halving HBM traffic for the bandwidth-bound head kernel.
# TODO(synk): the real HuggingFace pretrained encoder is not reproducible here.

def synthetic_encoder(x_ids, x_mask, emb, layer_ws, layer_bs,
                      *, out_dtype=jnp.bfloat16):
    h = emb[x_ids] * x_mask[..., None].astype(emb.dtype)      # (B, S, H)
    hidden_states = [h]
    for W, b in zip(layer_ws, layer_bs):
        h = jnp.tanh(h @ W + b)
        hidden_states.append(h)
    return jnp.stack(hidden_states, axis=0).astype(out_dtype)  # (NL+1, B, S, H)


# --------------------------------- main -------------------------------------

if __name__ == "__main__":
    # Small shapes consistent with the module (downscaled from H=768)
    B, S, H = 16, 32, 32         # batch, seq, hidden_size
    F, O = 100, 10               # feature_size, output_size
    VOCAB = 50
    NUM_LAYERS = 4               # synthetic encoder depth
    FEATURE_LAYERS = [2, 3]      # "top_n" style: last two hidden-state layers

    key = jax.random.PRNGKey(0)
    keys = jax.random.split(key, 8 + 2 * NUM_LAYERS)

    # deterministic inputs
    x_ids = jax.random.randint(keys[0], (B, S), 0, VOCAB)
    # NOTE: like the original module, the sequence mean includes padded tokens
    # (plain torch.mean(dim=1)); the mask only zeroes the embeddings here.
    x_mask = jnp.concatenate(
        [jnp.ones((B, S - 2), jnp.int32), jnp.zeros((B, 2), jnp.int32)], axis=1)

    # synthetic encoder parameters
    emb = jax.random.normal(keys[1], (VOCAB, H), jnp.float32) * 0.1
    layer_ws = [jax.random.normal(keys[2 + i], (H, H), jnp.float32) * (1.0 / jnp.sqrt(H))
                for i in range(NUM_LAYERS)]
    layer_bs = [jax.random.normal(keys[2 + NUM_LAYERS + i], (H,), jnp.float32) * 0.01
                for i in range(NUM_LAYERS)]

    # head parameters (Xavier-uniform style, deterministic; PyTorch (out,in) layout)
    def xavier_uniform(k, fan_in, fan_out):
        limit = jnp.sqrt(6.0 / (fan_in + fan_out))
        return jax.random.uniform(k, (fan_out, fan_in), jnp.float32, -limit, limit)

    wa_pt = xavier_uniform(keys[2 + 2 * NUM_LAYERS], H, F)      # (F, H)
    ba = jnp.zeros((F,), jnp.float32)
    wc_pt = xavier_uniform(keys[3 + 2 * NUM_LAYERS], F, O)      # (O, F)
    bc = jnp.zeros((O,), jnp.float32)

    # encoder (plain JAX glue) -> full hidden-state stack, stored bf16 in HBM
    hs_all = synthetic_encoder(x_ids, x_mask, emb, layer_ws, layer_bs)  # (NL+1,B,S,H) bf16
    layer_ids = jnp.array(FEATURE_LAYERS, dtype=jnp.int32)

    # pre-transpose weights to (in, out) for the kernel's row-major matmuls
    wa = wa_pt.T    # (H, F)
    wc = wc_pt.T    # (F, O)

    # s_blk=16 keeps bf16 sublane alignment and exercises the S-axis reduction
    # (grid = (B//b_blk, L, S//s_blk) = (2, 2, 2); b_blk defaults to 8).
    out = ptm_classifier_head(hs_all, layer_ids, wa, ba, wc, bc, s_blk=16)
    out = jax.block_until_ready(out)

    # pure-JAX reference check of the head math (same bf16 inputs, f32 math)
    stacked_sel = hs_all[layer_ids].astype(jnp.float32)           # (L, B, S, H)
    enc_ref = jnp.mean(jnp.mean(stacked_sel, axis=0), axis=1)     # (B, H)
    feat_ref = jnp.maximum(enc_ref @ wa + ba, 0.0)
    ref = feat_ref @ wc + bc

    assert out.shape == (B, O)
    assert jnp.allclose(out, ref, atol=5e-3, rtol=5e-3)

    print("KERNEL_OK")
</pallas_src>

<mosaic_0001>
module attributes {stable_mosaic.version = 11 : i64} {
  func.func @ptm_head_kernel(%arg0: i32, %arg1: i32, %arg2: i32, %arg3: memref<2xi32, #tpu.memory_space<smem>>, %arg4: memref<1x8x16x32xbf16, #tpu.memory_space<vmem>>, %arg5: memref<8x128xbf16, #tpu.memory_space<vmem>>, %arg6: memref<32x128xf32, #tpu.memory_space<vmem>>, %arg7: memref<1x128xf32, #tpu.memory_space<vmem>>, %arg8: memref<128x128xf32, #tpu.memory_space<vmem>>, %arg9: memref<1x128xf32, #tpu.memory_space<vmem>>, %arg10: memref<8x128xf32, #tpu.memory_space<vmem>>, %arg11: memref<8x32xf32, #tpu.memory_space<vmem>>) attributes {dimension_semantics = [#tpu.dimension_semantics<parallel>, #tpu.dimension_semantics<arbitrary>, #tpu.dimension_semantics<arbitrary>], iteration_bounds = array<i64: 2, 2, 2>, scalar_prefetch = 1 : i64, scratch_operands = 1 : i64, tpu.core_type = #tpu.core_type<tc>, window_params = [{transform_indices = @transform_0, window_bounds = array<i64: 1, 8, 16, 32>}, {pipeline_mode = #tpu.pipeline_mode<synchronous>, transform_indices = @transform_1, window_bounds = array<i64: 8, 128>}, {pipeline_mode = #tpu.pipeline_mode<synchronous>, transform_indices = @transform_2, window_bounds = array<i64: 32, 128>}, {pipeline_mode = #tpu.pipeline_mode<synchronous>, transform_indices = @transform_3, window_bounds = array<i64: 1, 128>}, {pipeline_mode = #tpu.pipeline_mode<synchronous>, transform_indices = @transform_4, window_bounds = array<i64: 128, 128>}, {pipeline_mode = #tpu.pipeline_mode<synchronous>, transform_indices = @transform_5, window_bounds = array<i64: 1, 128>}, {transform_indices = @transform_6, window_bounds = array<i64: 8, 128>}]} {
    %c0_i32 = arith.constant 0 : i32
    %0 = arith.cmpi eq, %arg1, %c0_i32 : i32
    %c0_i32_0 = arith.constant 0 : i32
    %1 = arith.cmpi eq, %arg2, %c0_i32_0 : i32
    %2 = arith.andi %0, %1 : i1
    %3 = arith.extui %2 : i1 to i32
    %c0_i32_1 = arith.constant 0 : i32
    %4 = arith.cmpi ne, %3, %c0_i32_1 : i32
    scf.if %4 {
      %cst_13 = arith.constant 0.000000e+00 : f32
      %18 = vector.broadcast %cst_13 : f32 to vector<8x32xf32>
      %c0_14 = arith.constant 0 : index
      %c0_15 = arith.constant 0 : index
      %19 = vector.load %arg11[%c0_14, %c0_15] : memref<8x32xf32, #tpu.memory_space<vmem>>, vector<8x32xf32>
      tpu.vector_store %arg11[%c0_14, %c0_15], %18 {strides = array<i32>} : memref<8x32xf32, #tpu.memory_space<vmem>>, vector<8x32xf32>,
    } else {
    }
    %c0 = arith.constant 0 : index
    %c0_2 = arith.constant 0 : index
    %c0_3 = arith.constant 0 : index
    %c0_4 = arith.constant 0 : index
    %5 = vector.load %arg4[%c0, %c0_2, %c0_3, %c0_4] : memref<1x8x16x32xbf16, #tpu.memory_space<vmem>>, vector<1x8x16x32xbf16>
    %6 = vector.shape_cast %5 : vector<1x8x16x32xbf16> to vector<8x16x32xbf16>
    %7 = vector.shape_cast %6 : vector<8x16x32xbf16> to vector<128x32xbf16>
    %c0_5 = arith.constant 0 : index
    %c0_6 = arith.constant 0 : index
    %8 = vector.load %arg11[%c0_5, %c0_6] : memref<8x32xf32, #tpu.memory_space<vmem>>, vector<8x32xf32>
    %c0_7 = arith.constant 0 : index
    %c0_8 = arith.constant 0 : index
    %9 = vector.load %arg5[%c0_7, %c0_8] : memref<8x128xbf16, #tpu.memory_space<vmem>>, vector<8x128xbf16>
    %cst = arith.constant dense<0.000000e+00> : vector<8x32xf32>
    %10 = tpu.matmul %9, %7, %cst {dimension_numbers = #tpu.dot_dimension_numbers<[1], [0], [0], [1], [0, 0, 1, 1], [], []>} : vector<8x128xbf16>, vector<128x32xbf16>, vector<8x32xf32> -> vector<8x32xf32>
    %11 = arith.addf %8, %10 : vector<8x32xf32>
    %c0_9 = arith.constant 0 : index
    %c0_10 = arith.constant 0 : index
    %12 = vector.load %arg11[%c0_9, %c0_10] : memref<8x32xf32, #tpu.memory_space<vmem>>, vector<8x32xf32>
    tpu.vector_store %arg11[%c0_9, %c0_10], %11 {strides = array<i32>} : memref<8x32xf32, #tpu.memory_space<vmem>>, vector<8x32xf32>,
    %c1_i32 = arith.constant 1 : i32
    %13 = arith.cmpi eq, %arg1, %c1_i32 : i32
    %c1_i32_11 = arith.constant 1 : i32
    %14 = arith.cmpi eq, %arg2, %c1_i32_11 : i32
    %15 = arith.andi %13, %14 : i1
    %16 = arith.extui %15 : i1 to i32
    %c0_i32_12 = arith.constant 0 : i32
    %17 = arith.cmpi ne, %16, %c0_i32_12 : i32
    scf.if %17 {
      %c0_13 = arith.constant 0 : index
      %c0_14 = arith.constant 0 : index
      %18 = vector.load %arg11[%c0_13, %c0_14] : memref<8x32xf32, #tpu.memory_space<vmem>>, vector<8x32xf32>
      %c0_15 = arith.constant 0 : index
      %c0_16 = arith.constant 0 : index
      %19 = vector.load %arg6[%c0_15, %c0_16] : memref<32x128xf32, #tpu.memory_space<vmem>>, vector<32x128xf32>
      %cst_17 = arith.constant dense<0.000000e+00> : vector<8x128xf32>
      %20 = tpu.matmul %18, %19, %cst_17 {dimension_numbers = #tpu.dot_dimension_numbers<[1], [0], [0], [1], [0, 0, 1, 1], [], []>} : vector<8x32xf32>, vector<32x128xf32>, vector<8x128xf32> -> vector<8x128xf32>
      %c0_18 = arith.constant 0 : index
      %c0_19 = arith.constant 0 : index
      %21 = vector.load %arg7[%c0_18, %c0_19] : memref<1x128xf32, #tpu.memory_space<vmem>>, vector<1x128xf32>
      %22 = vector.broadcast %21 : vector<1x128xf32> to vector<8x128xf32>
      %23 = arith.addf %20, %22 : vector<8x128xf32>
      %cst_20 = arith.constant 0.000000e+00 : f32
      %24 = vector.broadcast %cst_20 : f32 to vector<8x128xf32>
      %25 = arith.maximumf %23, %24 : vector<8x128xf32>
      %c0_21 = arith.constant 0 : index
      %c0_22 = arith.constant 0 : index
      %26 = vector.load %arg8[%c0_21, %c0_22] : memref<128x128xf32, #tpu.memory_space<vmem>>, vector<128x128xf32>
      %cst_23 = arith.constant dense<0.000000e+00> : vector<8x128xf32>
      %27 = tpu.matmul %25, %26, %cst_23 {dimension_numbers = #tpu.dot_dimension_numbers<[1], [0], [0], [1], [0, 0, 1, 1], [], []>} : vector<8x128xf32>, vector<128x128xf32>, vector<8x128xf32> -> vector<8x128xf32>
      %c0_24 = arith.constant 0 : index
      %c0_25 = arith.constant 0 : index
      %28 = vector.load %arg9[%c0_24, %c0_25] : memref<1x128xf32, #tpu.memory_space<vmem>>, vector<1x128xf32>
      %29 = vector.broadcast %28 : vector<1x128xf32> to vector<8x128xf32>
      %30 = arith.addf %27, %29 : vector<8x128xf32>
      %c0_26 = arith.constant 0 : index
      %c0_27 = arith.constant 0 : index
      %31 = vector.load %arg10[%c0_26, %c0_27] : memref<8x128xf32, #tpu.memory_space<vmem>>, vector<8x128xf32>
      tpu.vector_store %arg10[%c0_26, %c0_27], %30 {strides = array<i32>} : memref<8x128xf32, #tpu.memory_space<vmem>>, vector<8x128xf32>,
    } else {
    }
    return
  }
  func.func @transform_0(%arg0: i32, %arg1: i32, %arg2: i32, %arg3: memref<2xi32, #tpu.memory_space<smem>>) -> (i32, i32, i32, i32) {
    %0 = arith.index_cast %arg1 : i32 to index
    %1 = memref.load %arg3[%0] : memref<2xi32, #tpu.memory_space<smem>>
    %c0_i32 = arith.constant 0 : i32
    %c0_i32_0 = arith.constant 0 : i32
    return %1, %arg0, %arg2, %c0_i32 : i32, i32, i32, i32
  }
  func.func @transform_1(%arg0: i32, %arg1: i32, %arg2: i32, %arg3: memref<2xi32, #tpu.memory_space<smem>>) -> (i32, i32) {
    %c0_i32 = arith.constant 0 : i32
    %c0_i32_0 = arith.constant 0 : i32
    %c0_i32_1 = arith.constant 0 : i32
    return %c0_i32, %c0_i32_0 : i32, i32
  }
  func.func @transform_2(%arg0: i32, %arg1: i32, %arg2: i32, %arg3: memref<2xi32, #tpu.memory_space<smem>>) -> (i32, i32) {
    %c0_i32 = arith.constant 0 : i32
    %c0_i32_0 = arith.constant 0 : i32
    %c0_i32_1 = arith.constant 0 : i32
    return %c0_i32, %c0_i32_0 : i32, i32
  }
  func.func @transform_3(%arg0: i32, %arg1: i32, %arg2: i32, %arg3: memref<2xi32, #tpu.memory_space<smem>>) -> (i32, i32) {
    %c0_i32 = arith.constant 0 : i32
    %c0_i32_0 = arith.constant 0 : i32
    %c0_i32_1 = arith.constant 0 : i32
    return %c0_i32, %c0_i32_0 : i32, i32
  }
  func.func @transform_4(%arg0: i32, %arg1: i32, %arg2: i32, %arg3: memref<2xi32, #tpu.memory_space<smem>>) -> (i32, i32) {
    %c0_i32 = arith.constant 0 : i32
    %c0_i32_0 = arith.constant 0 : i32
    %c0_i32_1 = arith.constant 0 : i32
    return %c0_i32, %c0_i32_0 : i32, i32
  }
  func.func @transform_5(%arg0: i32, %arg1: i32, %arg2: i32, %arg3: memref<2xi32, #tpu.memory_space<smem>>) -> (i32, i32) {
    %c0_i32 = arith.constant 0 : i32
    %c0_i32_0 = arith.constant 0 : i32
    %c0_i32_1 = arith.constant 0 : i32
    return %c0_i32, %c0_i32_0 : i32, i32
  }
  func.func @transform_6(%arg0: i32, %arg1: i32, %arg2: i32, %arg3: memref<2xi32, #tpu.memory_space<smem>>) -> (i32, i32) {
    %c0_i32 = arith.constant 0 : i32
    %c0_i32_0 = arith.constant 0 : i32
    return %arg0, %c0_i32 : i32, i32
  }
}

</mosaic_0001>

<llo_original>
// kernel: tpu_custom_call.1
$region0: #{tpu_custom_call.1}
  #allocation0 [shape = 'u32[]', space=smem, size = 0x4, offset = 0x4, fixed_abs, tag = 'smem constant byte address 0x4 - core index']
  #allocation1 [shape = 'u32[72,128]{1,0:T(1,128)}', space=vmem, size = 0x9000, scoped, tag = 'internal scratch']
  #allocation2 [shape = 'f32[8,32]{1,0:T(8,128)}', space=vmem, size = 0x1000, scoped, tag = 'scratch operand']
  #allocation3 [shape = 's32[1]{0}', space=sflag, size = 0x4, scoped, tag = 'scoped memory for tpu_custom_call.1']
  #allocation4 [shape = 'u8[512]{0}', space=smem, size = 0x200, scoped, tag = 'prefetched SMEM operand 0']
  #allocation14 [shape = 's32[]', space=sflag, size = 0x4, offset = 0, fixed_abs, tag = 'sflag constant byte address 0x0 - dummy sync flag']
  %s0 = inlined_call_operand.hbm [shape: s32[2], index: 0, kind: input, shape index: {}]
  %s1 = inlined_call_operand.hbm [shape: bf16[5,16,32,32], index: 1, kind: input, shape index: {}]
  %s2 = inlined_call_operand.hbm [shape: bf16[8,128], index: 2, kind: input, shape index: {}]
  %s3 = inlined_call_operand.hbm [shape: f32[32,128], index: 3, kind: input, shape index: {}]
  %s4 = inlined_call_operand.vmem [shape: f32[1,128], index: 4, kind: input, shape index: {}]
  %s5 = inlined_call_operand.hbm [shape: f32[128,128], index: 5, kind: input, shape index: {}]
  %s6 = inlined_call_operand.vmem [shape: f32[1,128], index: 6, kind: input, shape index: {}]
  %s7 = inlined_call_operand.hbm [shape: f32[16,128], index: 7, kind: output, shape index: {}]
  %s8 = sld [smem:[#allocation0]]
  $region81: #{tpu_custom_call.1} parent=0
    _
  %s10 = ssub.s32 1, %s8
  %s11 = scalar_select 0, %s10, %s8
  %s13 = sshll.u32 %s0, 4
  %s14 = int_to_ptr.hbm [resolvable:$true] %s13
  %16 = dma.hbm_to_smem %s14, 16, [#allocation4], [#allocation3]
  %18 = dma.done [#allocation3], 16
  %19 = sfence
  $region1: #{tpu_custom_call.1} parent=0
    #allocation5 [shape = 'u8[65536]{0}', space=vmem, size = 0x10000, scoped, tag = 'input window, operand 1']
    #allocation6 [shape = 's32[2]{0}', space=sflag, size = 0x8, scoped, tag = 'scoped memory for tpu_custom_call.1']
    #allocation7 [shape = 's32[2]{0}', space=sflag, size = 0x8, scoped, tag = 'scoped memory for tpu_custom_call.1']
    #allocation8 [shape = 'u8[2048]{0}', space=vmem, size = 0x800, scoped, tag = 'input window, operand 2, single buffered']
    #allocation9 [shape = 's32[1]{0}', space=sflag, size = 0x4, scoped, tag = 'scoped memory for tpu_custom_call.1']
    #allocation10 [shape = 'u8[16384]{0}', space=vmem, size = 0x4000, scoped, tag = 'input window, operand 3, single buffered']
    #allocation11 [shape = 'u8[65536]{0}', space=vmem, size = 0x10000, scoped, tag = 'input window, operand 5, single buffered']
    #allocation12 [shape = 's32[1]{0}', space=sflag, size = 0x4, scoped, tag = 'scoped memory for tpu_custom_call.1']
    #allocation13 [shape = 'u8[8192]{0}', space=vmem, size = 0x2000, scoped, tag = 'output window, operand 0']
    %20 = vsyncpa [#allocation6], 0
    %s21 = scalar_lea.sflag [#allocation6], 1
    %22 = vsyncpa %s21, 0
    %23 = vsyncpa [#allocation9], 0
    %24 = vsyncpa [#allocation12], 0
    %25 = vsyncpa [#allocation7], 0
    %s26 = scalar_lea.sflag [#allocation7], 1
    %27 = vsyncpa %s26, 0
    loop: start=0, step=1, limit=10
    $region2: #{tpu_custom_call.1} parent=1 // loop_pre_header
      _
    $region3: #{tpu_custom_call.1} parent=1 // loop_header
      %s29 = sphi 0, %s33
      %p30 = scmp.ge.s32.totalorder %s29, 10
      %s36 = sphi 0, %s55
      %s37 = sphi 0, %s51
      %s38 = sphi 0, %s47
      %s39 = sphi 0, %s36
      %s40 = sphi 0, %s37
      %s41 = sphi 0, %s38
      %s42 = sphi 0, %s39
      %s43 = sphi 0, %s40
      %s44 = sphi 0, %s41
      %s64 = sphi 0, %s66
      %s67 = sphi 0, %s64
      %s68 = sphi 0, %s67
      %s84 = sphi 0, %s68
      %s88 = sphi 0, %s88
      %s90 = sphi 0, %s88
      %s91 = sphi 0, %s90
      %s105 = sphi 0, %s91
      %s109 = sphi 0, %s109
      %s111 = sphi 0, %s109
      %s112 = sphi 0, %s111
      %s126 = sphi 0, %s112
      %s130 = sphi 0, %s130
      %s132 = sphi 0, %s130
      %s133 = sphi 0, %s132
      %s147 = sphi 0, %s133
      %s151 = sphi 0, %s151
      %s153 = sphi 0, %s151
      %s154 = sphi 0, %s153
      %s168 = sphi 0, %s154
      %s172 = sphi 0, %s172
      %s174 = sphi 0, %s172
      %s175 = sphi 0, %s174
      %s189 = sphi 0, %s175
      %s195 = sphi 0, %s197
      %s198 = sphi 0, %s195
      %s199 = sphi 0, %s198
      %s215 = sphi 0, %s199
    $region4: #{tpu_custom_call.1} parent=1 // loop_header_branch
      %32 = sbr.rel (%p30) target = $region8
    $region5: #{tpu_custom_call.1} parent=1 // loop_body
      %s34 = ssub.s32 %s29, 1
      %s35 = ssub.s32 %s29, 2
      %s45 = sadd.s32 1, %s38
      %p46 = scmp.ge.s32.totalorder %s45, 2
      %s47 = scalar_select %p46, 0, %s45
      %s48 = sadd.s32 1, %s37
      %s49 = scalar_select %p46, %s48, %s37
      %p50 = scmp.ge.s32.totalorder %s49, 2
      %s51 = scalar_select %p50, 0, %s49
      %s52 = sadd.s32 1, %s36
      %s53 = scalar_select %p50, %s52, %s36
      %p54 = scmp.ge.s32.totalorder %s53, 2
      %s55 = scalar_select %p54, 0, %s53
      %s56 = sld [smem:[#allocation4 + %s37]]
      %s57 = sld [smem:[#allocation4 + %s51]]
      %s58 = ssub.s32 %s56, %s57
      %s59 = ssub.s32 %s36, %s55
      %s60 = sor.u32 %s58, %s59
      %s61 = ssub.s32 %s38, %s47
      %s62 = sor.u32 %s60, %s61
      %p63 = scmp.eq.s32.totalorder %s62, 0
      %s65 = sadd.s32 %s64, 1
      %s66 = scalar_select %p63, %s64, %s65
      %p69 = pneg %p63
      %p70 = scmp.eq.s32.totalorder %s29, 7
      %p71 = por %p69, %p70
      %p72 = scmp.ne.s32.totalorder %s64, %s67
      %p73 = scmp.eq.s32.totalorder %s29, 0
      %p74 = por %p72, %p73
      %p75 = scmp.ne.s32.totalorder %s64, %s67
      %p76 = scmp.eq.s32.totalorder %s34, 7
      %p77 = por %p75, %p76
      %p78 = scmp.ne.s32.totalorder %s67, %s68
      %p79 = scmp.eq.s32.totalorder %s34, 0
      %p80 = por %p78, %p79
      %p81 = scmp.ne.s32.totalorder %s67, %s68
      %p82 = scmp.eq.s32.totalorder %s35, 7
      %p83 = por %p81, %p82
      %p85 = scmp.ne.s32.totalorder %s68, %s84
      %p86 = scmp.eq.s32.totalorder %s35, 0
      %p87 = por %p85, %p86
      %s89 = sadd.s32 %s88, 1
      %p92 = scmp.eq.s32.totalorder %s29, 7
      %p93 = scmp.ne.s32.totalorder %s88, %s90
      %p94 = scmp.eq.s32.totalorder %s29, 0
      %p95 = por %p93, %p94
      %p96 = scmp.ne.s32.totalorder %s88, %s90
      %p97 = scmp.eq.s32.totalorder %s34, 7
      %p98 = por %p96, %p97
      %p99 = scmp.ne.s32.totalorder %s90, %s91
      %p100 = scmp.eq.s32.totalorder %s34, 0
      %p101 = por %p99, %p100
      %p102 = scmp.ne.s32.totalorder %s90, %s91
      %p103 = scmp.eq.s32.totalorder %s35, 7
      %p104 = por %p102, %p103
      %p106 = scmp.ne.s32.totalorder %s91, %s105
      %p107 = scmp.eq.s32.totalorder %s35, 0
      %p108 = por %p106, %p107
      %s110 = sadd.s32 %s109, 1
      %p113 = scmp.eq.s32.totalorder %s29, 7
      %p114 = scmp.ne.s32.totalorder %s109, %s111
      %p115 = scmp.eq.s32.totalorder %s29, 0
      %p116 = por %p114, %p115
      %p117 = scmp.ne.s32.totalorder %s109, %s111
      %p118 = scmp.eq.s32.totalorder %s34, 7
      %p119 = por %p117, %p118
      %p120 = scmp.ne.s32.totalorder %s111, %s112
      %p121 = scmp.eq.s32.totalorder %s34, 0
      %p122 = por %p120, %p121
      %p123 = scmp.ne.s32.totalorder %s111, %s112
      %p124 = scmp.eq.s32.totalorder %s35, 7
      %p125 = por %p123, %p124
      %p127 = scmp.ne.s32.totalorder %s112, %s126
      %p128 = scmp.eq.s32.totalorder %s35, 0
      %p129 = por %p127, %p128
      %s131 = sadd.s32 %s130, 1
      %p134 = scmp.eq.s32.totalorder %s29, 7
      %p135 = scmp.ne.s32.totalorder %s130, %s132
      %p136 = scmp.eq.s32.totalorder %s29, 0
      %p137 = por %p135, %p136
      %p138 = scmp.ne.s32.totalorder %s130, %s132
      %p139 = scmp.eq.s32.totalorder %s34, 7
      %p140 = por %p138, %p139
      %p141 = scmp.ne.s32.totalorder %s132, %s133
      %p142 = scmp.eq.s32.totalorder %s34, 0
      %p143 = por %p141, %p142
      %p144 = scmp.ne.s32.totalorder %s132, %s133
      %p145 = scmp.eq.s32.totalorder %s35, 7
      %p146 = por %p144, %p145
      %p148 = scmp.ne.s32.totalorder %s133, %s147
      %p149 = scmp.eq.s32.totalorder %s35, 0
      %p150 = por %p148, %p149
      %s152 = sadd.s32 %s151, 1
      %p155 = scmp.eq.s32.totalorder %s29, 7
      %p156 = scmp.ne.s32.totalorder %s151, %s153
      %p157 = scmp.eq.s32.totalorder %s29, 0
      %p158 = por %p156, %p157
      %p159 = scmp.ne.s32.totalorder %s151, %s153
      %p160 = scmp.eq.s32.totalorder %s34, 7
      %p161 = por %p159, %p160
      %p162 = scmp.ne.s32.totalorder %s153, %s154
      %p163 = scmp.eq.s32.totalorder %s34, 0
      %p164 = por %p162, %p163
      %p165 = scmp.ne.s32.totalorder %s153, %s154
      %p166 = scmp.eq.s32.totalorder %s35, 7
      %p167 = por %p165, %p166
      %p169 = scmp.ne.s32.totalorder %s154, %s168
      %p170 = scmp.eq.s32.totalorder %s35, 0
      %p171 = por %p169, %p170
      %s173 = sadd.s32 %s172, 1
      %p176 = scmp.eq.s32.totalorder %s29, 7
      %p177 = scmp.ne.s32.totalorder %s172, %s174
      %p178 = scmp.eq.s32.totalorder %s29, 0
      %p179 = por %p177, %p178
      %p180 = scmp.ne.s32.totalorder %s172, %s174
      %p181 = scmp.eq.s32.totalorder %s34, 7
      %p182 = por %p180, %p181
      %p183 = scmp.ne.s32.totalorder %s174, %s175
      %p184 = scmp.eq.s32.totalorder %s34, 0
      %p185 = por %p183, %p184
      %p186 = scmp.ne.s32.totalorder %s174, %s175
      %p187 = scmp.eq.s32.totalorder %s35, 7
      %p188 = por %p186, %p187
      %p190 = scmp.ne.s32.totalorder %s175, %s189
      %p191 = scmp.eq.s32.totalorder %s35, 0
      %p192 = por %p190, %p191
      %s193 = ssub.s32 %s36, %s55
      %p194 = scmp.eq.s32.totalorder %s193, 0
      %s196 = sadd.s32 %s195, 1
      %s197 = scalar_select %p194, %s195, %s196
      %p200 = pneg %p194
      %p201 = scmp.eq.s32.totalorder %s29, 7
      %p202 = por %p200, %p201
      %p203 = scmp.ne.s32.totalorder %s195, %s198
      %p204 = scmp.eq.s32.totalorder %s29, 0
      %p205 = por %p203, %p204
      %p206 = scmp.ne.s32.totalorder %s195, %s198
      %p207 = scmp.eq.s32.totalorder %s34, 7
      %p208 = por %p206, %p207
      %p209 = scmp.ne.s32.totalorder %s198, %s199
      %p210 = scmp.eq.s32.totalorder %s34, 0
      %p211 = por %p209, %p210
      %p212 = scmp.ne.s32.totalorder %s198, %s199
      %p213 = scmp.eq.s32.totalorder %s35, 7
      %p214 = por %p212, %p213
      %p216 = scmp.ne.s32.totalorder %s199, %s215
      %p217 = scmp.eq.s32.totalorder %s35, 0
      %p218 = por %p216, %p217
      %p219 = scmp.le.s32.totalorder 1, %s29
      %p220 = scmp.lt.s32.totalorder %s29, 9
      %p221 = pnand %p219, %p220
      %p222 = pneg %p221
      // Predicated region
      $region9: #{tpu_custom_call.1} parent=5 // pred_check
        _
      $region10: #{tpu_custom_call.1} parent=5 // pred_check_branch
        %224 = sbr.rel (%p221) target = $region12
      $region11: #{tpu_custom_call.1} parent=5 // pred_region
        %s225 = ssub.s32 %s29, 1
        // Predicated region
        $region13: #{tpu_custom_call.1} parent=11 // pred_check
          %p226 = pneg %p101
        $region14: #{tpu_custom_call.1} parent=11 // pred_check_branch
          %228 = sbr.rel (%p226) target = $region16
        $region15: #{tpu_custom_call.1} parent=11 // pred_region
          %230 = vsyncadd [#allocation9], 0
          %s232 = sshll.u32 %s2, 4
          %s233 = int_to_ptr.hbm [resolvable:$true] %s232
          %s234 = sshll.u32 [#allocation8], 4
          %s235 = int_to_ptr.vmem [resolvable:$true] %s234
          %237 = dma.hbm_to_vmem [thread:$0]  %s233, 64, %s235, [#allocation9]
        $region16: #{tpu_custom_call.1} parent=11 // pred_fallthru
          _
        // Predicated region
        $region17: #{tpu_custom_call.1} parent=11 // pred_check
          %p238 = pneg %p122
        $region18: #{tpu_custom_call.1} parent=11 // pred_check_branch
          %240 = sbr.rel (%p238) target = $region20
        $region19: #{tpu_custom_call.1} parent=11 // pred_region
          %242 = vsyncadd [#allocation9], 0
          %s243 = sshll.u32 %s3, 4
          %s244 = int_to_ptr.hbm [resolvable:$true] %s243
          %s245 = sshll.u32 [#allocation10], 4
          %s246 = int_to_ptr.vmem [resolvable:$true] %s245
          %251 = dma.hbm_to_vmem [thread:$0]  %s244, 512, %s246, [#allocation9], 128, 128, 8
        $region20: #{tpu_custom_call.1} parent=11 // pred_fallthru
          _
        // Predicated region
        $region21: #{tpu_custom_call.1} parent=11 // pred_check
          %p252 = pneg %p143
        $region22: #{tpu_custom_call.1} parent=11 // pred_check_branch
          %254 = sbr.rel (%p252) target = $region24
        $region23: #{tpu_custom_call.1} parent=11 // pred_region
          _
        $region24: #{tpu_custom_call.1} parent=11 // pred_fallthru
          _
        // Predicated region
        $region25: #{tpu_custom_call.1} parent=11 // pred_check
          %p255 = pneg %p164
        $region26: #{tpu_custom_call.1} parent=11 // pred_check_branch
          %257 = sbr.rel (%p255) target = $region28
        $region27: #{tpu_custom_call.1} parent=11 // pred_region
          %259 = vsyncadd [#allocation12], 0
          %s260 = sshll.u32 %s5, 4
          %s261 = int_to_ptr.hbm [resolvable:$true] %s260
          %s262 = sshll.u32 [#allocation11], 4
          %s263 = int_to_ptr.vmem [resolvable:$true] %s262
          %268 = dma.hbm_to_vmem [thread:$0]  %s261, 2048, %s263, [#allocation12], 128, 128, 8
        $region28: #{tpu_custom_call.1} parent=11 // pred_fallthru
          _
        // Predicated region
        $region29: #{tpu_custom_call.1} parent=11 // pred_check
          %p269 = pneg %p185
        $region30: #{tpu_custom_call.1} parent=11 // pred_check_branch
          %271 = sbr.rel (%p269) target = $region32
        $region31: #{tpu_custom_call.1} parent=11 // pred_region
          _
        $region32: #{tpu_custom_call.1} parent=11 // pred_fallthru
          _
      $region12: #{tpu_custom_call.1} parent=5 // pred_fallthru
        _
      %p272 = scmp.lt.s32.totalorder %s29, 8
      // Predicated region
      $region33: #{tpu_custom_call.1} parent=5 // pred_check
        %p273 = pneg %p272
      $region34: #{tpu_custom_call.1} parent=5 // pred_check_branch
        %275 = sbr.rel (%p273) target = $region36
      $region35: #{tpu_custom_call.1} parent=5 // pred_region
        // Predicated region
        $region37: #{tpu_custom_call.1} parent=35 // pred_check
          %p276 = pneg %p74
        $region38: #{tpu_custom_call.1} parent=35 // pred_check_branch
          %278 = sbr.rel (%p276) target = $region40
        $region39: #{tpu_custom_call.1} parent=35 // pred_region
          #allocation15 [shape = 'u32[6]{0}', space=smem, size = 0x18, scoped, tag = 'DMA stride descriptor']
          %s279 = sand.u32 %s64, 1
          %s280 = scalar_lea.sflag [#allocation6], %s279
          %s281 = sand.u32 %s64, 1
          %s282 = smul.addr %s281, 64
          %s283 = scalar_lea.vmem [#allocation5], %s282
          %s284 = sld [smem:[#allocation4 + %s37]]
          %s285 = smul.u32 8, %s36
          %s286 = smul.u32 2, %s38
          %288 = vsyncadd %s280, 0
          %s289 = smul.addr %s285, 4
          %s290 = sadd.s32 %s286, %s289
          %s291 = smul.addr %s284, 64
          %s292 = sadd.s32 %s290, %s291
          %s293 = smul.addr %s292, 4
          %s294 = scalar_lea.hbm %s1, %s293
          %s296 = sshll.u32 1, 14
          %s297 = sxor.u32 4294967295, %s296
          %s299 = sld [smem:[#allocation0]]
          %s300 = sadd.s32 2, %s299
          %s302 = sshll.u32 7, 26
          %s303 = sxor.u32 4294967295, %s302
          %s304 = sand.u32 0, %s303
          %s305 = sshll.u32 %s300, 26
          %s306 = sor.u32 %s304, %s305
          %s307 = sshll.u32 %s294, 4
          %s308 = int_to_ptr.hbm [resolvable:$true] %s307
          %s309 = sshll.u32 %s283, 4
          %s310 = int_to_ptr.vmem [resolvable:$true] %s309
          %316 = sst [smem:[#allocation15]] 256
          %s317 = scalar_lea.smem [#allocation15], 1
          %318 = sst [smem:[%s317]] 128
          %s319 = scalar_lea.smem [#allocation15], 2
          %320 = sst [smem:[%s319]] 2
          %s321 = scalar_lea.smem [#allocation15], 3
          %322 = sst [smem:[%s321]] 64
          %s323 = scalar_lea.smem [#allocation15], 4
          %324 = sst [smem:[%s323]] 64
          %s325 = scalar_lea.smem [#allocation15], 5
          %326 = sst [smem:[%s325]] 4
          %328 = dma.general %s308, 1024, %s310, %s280, [#allocation14], [#allocation15], %s306, 0
        $region40: #{tpu_custom_call.1} parent=35 // pred_fallthru
          _
      $region36: #{tpu_custom_call.1} parent=5 // pred_fallthru
        _
      %p329 = scmp.le.s32.totalorder 1, %s29
      %p330 = scmp.lt.s32.totalorder %s29, 9
      %p331 = pnand %p329, %p330
      %p332 = pneg %p331
      // Predicated region
      $region41: #{tpu_custom_call.1} parent=5 // pred_check
        _
      $region42: #{tpu_custom_call.1} parent=5 // pred_check_branch
        %334 = sbr.rel (%p331) target = $region44
      $region43: #{tpu_custom_call.1} parent=5 // pred_region
        %s335 = ssub.s32 %s29, 1
        %s336 = sand.u32 %s67, 1
        %s337 = scalar_lea.sflag [#allocation6], %s336
        %s338 = sand.u32 %s67, 1
        %s339 = smul.addr %s338, 64
        %s340 = scalar_lea.vmem [#allocation5], %s339
        // Predicated region
        $region45: #{tpu_custom_call.1} parent=43 // pred_check
          %p341 = pneg %p80
        $region46: #{tpu_custom_call.1} parent=43 // pred_check_branch
          %343 = sbr.rel (%p341) target = $region48
        $region47: #{tpu_custom_call.1} parent=43 // pred_region
          %345 = dma.done %s337, 1024
        $region48: #{tpu_custom_call.1} parent=43 // pred_fallthru
          _
        // Predicated region
        $region49: #{tpu_custom_call.1} parent=43 // pred_check
          %p346 = pneg %p101
        $region50: #{tpu_custom_call.1} parent=43 // pred_check_branch
          %348 = sbr.rel (%p346) target = $region52
        $region51: #{tpu_custom_call.1} parent=43 // pred_region
          %350 = dma.done [#allocation9], 64
        $region52: #{tpu_custom_call.1} parent=43 // pred_fallthru
          _
        // Predicated region
        $region53: #{tpu_custom_call.1} parent=43 // pred_check
          %p351 = pneg %p122
        $region54: #{tpu_custom_call.1} parent=43 // pred_check_branch
          %353 = sbr.rel (%p351) target = $region56
        $region55: #{tpu_custom_call.1} parent=43 // pred_region
          %355 = dma.done [#allocation9], 512
        $region56: #{tpu_custom_call.1} parent=43 // pred_fallthru
          _
        // Predicated region
        $region57: #{tpu_custom_call.1} parent=43 // pred_check
          %p356 = pneg %p164
        $region58: #{tpu_custom_call.1} parent=43 // pred_check_branch
          %358 = sbr.rel (%p356) target = $region60
        $region59: #{tpu_custom_call.1} parent=43 // pred_region
          %360 = dma.done [#allocation12], 2048
        $region60: #{tpu_custom_call.1} parent=43 // pred_fallthru
          _
        %s361 = sand.u32 %s67, 1
        %s362 = scalar_lea.sflag [#allocation6], %s361
        %s363 = sand.u32 %s67, 1
        %s364 = smul.addr %s363, 64
        %s365 = scalar_lea.vmem [#allocation5], %s364
        %p366 = pneg %p80
        %p367 = pneg %p77
        %p368 = pneg %p101
        %p369 = pneg %p98
        %p370 = pneg %p122
        %p371 = pneg %p119
        %p372 = pneg %p143
        %p373 = pneg %p140
        %p374 = pneg %p164
        %p375 = pneg %p161
        %p376 = pneg %p185
        %p377 = pneg %p182
        %p378 = pneg %p211
        %p379 = pneg %p208
        %s380 = sand.u32 %s198, 1
        %s381 = scalar_lea.sflag [#allocation7], %s380
        %s382 = sand.u32 %s198, 1
        %s383 = smul.addr %s382, 8
        %s384 = scalar_lea.vmem [#allocation13], %s383
        %s385 = sld [smem:[#allocation4 + %s40]]
        %s386 = smul.u32 8, %s39
        %s387 = smul.u32 2, %s41
        %p388 = scmp.eq.s32.totalorder %s40, 0
        %p389 = scmp.eq.s32.totalorder %s41, 0
        %p390 = pnand %p388, %p389
        %p391 = pneg %p390
        // Predicated region
        $region61: #{tpu_custom_call.1} parent=43 // pred_check
          _
        $region62: #{tpu_custom_call.1} parent=43 // pred_check_branch
          %393 = sbr.rel (%p390) target = $region64
        $region63: #{tpu_custom_call.1} parent=43 // pred_region
          %vm394 = vcmask 261120
          %395 = vst.msk [vmem:[#allocation2] sm:$0xff] %vm394, 0.0
        $region64: #{tpu_custom_call.1} parent=43 // pred_fallthru
          _
        %v396 = vld [vmem:[%s340] sm:$0xf]
        %v397 = vld [vmem:[%s340 + $0x4] sm:$0xf]
        %v398 = vld [vmem:[%s340 + $0x8] sm:$0xf]
        %v399 = vld [vmem:[%s340 + $0xc] sm:$0xf]
        %v400 = vld [vmem:[%s340 + $0x10] sm:$0xf]
        %v401 = vld [vmem:[%s340 + $0x14] sm:$0xf]
        %v402 = vld [vmem:[%s340 + $0x18] sm:$0xf]
        %v403 = vld [vmem:[%s340 + $0x1c] sm:$0xf]
        %v404 = vld [vmem:[%s340 + $0x20] sm:$0xf]
        %v405 = vld [vmem:[%s340 + $0x24] sm:$0xf]
        %v406 = vld [vmem:[%s340 + $0x28] sm:$0xf]
        %v407 = vld [vmem:[%s340 + $0x2c] sm:$0xf]
        %v408 = vld [vmem:[%s340 + $0x30] sm:$0xf]
        %v409 = vld [vmem:[%s340 + $0x34] sm:$0xf]
        %v410 = vld [vmem:[%s340 + $0x38] sm:$0xf]
        %v411 = vld [vmem:[%s340 + $0x3c] sm:$0xf]
        %v412 = vld [vmem:[#allocation2] sm:$0xff]
        %v413 = vld [vmem:[#allocation8] sm:$0xf]
        %v430 = vunpack.c.l.b16 %v396
        %v431 = vunpack.c.l.b16 %v397
        %v432 = vunpack.c.l.b16 %v398
        %v433 = vunpack.c.l.b16 %v399
        %v434 = vunpack.c.l.b16 %v400
        %v435 = vunpack.c.l.b16 %v401
        %v436 = vunpack.c.l.b16 %v402
        %v437 = vunpack.c.l.b16 %v403
        %v438 = vunpack.c.l.b16 %v404
        %v439 = vunpack.c.l.b16 %v405
        %v440 = vunpack.c.l.b16 %v406
        %v441 = vunpack.c.l.b16 %v407
        %v442 = vunpack.c.l.b16 %v408
        %v443 = vunpack.c.l.b16 %v409
        %v444 = vunpack.c.l.b16 %v410
        %v445 = vunpack.c.l.b16 %v411
        %v446 = vpack.c.b16 %v431, %v430
        %v447 = vpack.c.b16 %v433, %v432
        %v448 = vpack.c.b16 %v435, %v434
        %v449 = vpack.c.b16 %v437, %v436
        %v450 = vpack.c.b16 %v439, %v438
        %v451 = vpack.c.b16 %v441, %v440
        %v452 = vpack.c.b16 %v443, %v442
        %v453 = vpack.c.b16 %v445, %v444
        %462 = vmatpush.bf16.msra.mxu0 %v453
        %463 = vmatpush.bf16.msra.mxu0 %v452
        %464 = vmatpush.bf16.msra.mxu0 %v451
        %465 = vmatpush.bf16.msra.mxu0 %v450
        %466 = vmatpush.bf16.msra.mxu0 %v449
        %467 = vmatpush.bf16.msra.mxu0 %v448
        %468 = vmatpush.bf16.msra.mxu0 %v447
        %469 = vmatpush.bf16.msra.mxu0 %v446
        %470 = vmatmul.bf16.gmra.mxu0 %v413
        %v471 = vpop.f32.mrf.mxu0
        %v472 = vadd.f32 0.0, %v471
        %v473 = vpop.f32.mrf.mxu0
        %474 = vdwg.mxu0
        %v475 = vadd.f32 %v412, %v472
        %vm476 = vcmask 261120
        %477 = vst.msk [vmem:[#allocation2] sm:$0xff] %vm476, %v475
        %p478 = scmp.eq.s32.totalorder %s40, 1
        %p479 = scmp.eq.s32.totalorder %s41, 1
        %p480 = pnand %p478, %p479
        %p481 = pneg %p480
        // Predicated region
        $region65: #{tpu_custom_call.1} parent=43 // pred_check
          _
        $region66: #{tpu_custom_call.1} parent=43 // pred_check_branch
          %483 = sbr.rel (%p480) target = $region68
        $region67: #{tpu_custom_call.1} parent=43 // pred_region
          %v484 = vld [vmem:[#allocation2] sm:$0xff]
          %v485 = vld [vmem:[#allocation10] sm:$0xff]
          %v486 = vld [vmem:[#allocation10 + $0x8] sm:$0xff]
          %v487 = vld [vmem:[#allocation10 + $0x10] sm:$0xff]
          %v488 = vld [vmem:[#allocation10 + $0x18] sm:$0xff]
          %v489 = vld [vmem:[%s4] sm:$0x1]
          %v491 = vperm.slane %v489, 0
          %v494 = vsel %vm476, %v484, 0
          %496 = vmatpush.msra.mxu0 0.0
          %497 = vmatpush.msra.mxu0 0.0
          %498 = vmatpush.msra.mxu0 0.0
          %499 = vmatpush.msra.mxu0 0.0
          %500 = vmatpush.msra.mxu0 0.0
          %501 = vmatpush.msra.mxu0 0.0
          %502 = vmatpush.msra.mxu0 0.0
          %503 = vmatpush.msra.mxu0 0.0
          %504 = vmatpush.msra.mxu0 0.0
          %505 = vmatpush.msra.mxu0 0.0
          %506 = vmatpush.msra.mxu0 0.0
          %507 = vmatpush.msra.mxu0 0.0
          %508 = vmatpush.msra.mxu0 %v488
          %509 = vmatpush.msra.mxu0 %v487
          %510 = vmatpush.msra.mxu0 %v486
          %511 = vmatpush.msra.mxu0 %v485
          %512 = vmatmul.f32.gmra.mxu0 %v494
          %v513 = vpop.f32.mrf.mxu0
          %v514 = vadd.f32 %v491, %v513
          %515 = vdwg.mxu0
          %v516 = vmax.f32 %v514, 0.0
          %v517 = vld [vmem:[#allocation11] sm:$0xff]
          %v518 = vld [vmem:[#allocation11 + $0x8] sm:$0xff]
          %v519 = vld [vmem:[#allocation11 + $0x10] sm:$0xff]
          %v520 = vld [vmem:[#allocation11 + $0x18] sm:$0xff]
          %v521 = vld [vmem:[#allocation11 + $0x20] sm:$0xff]
          %v522 = vld [vmem:[#allocation11 + $0x28] sm:$0xff]
          %v523 = vld [vmem:[#allocation11 + $0x30] sm:$0xff]
          %v524 = vld [vmem:[#allocation11 + $0x38] sm:$0xff]
          %v525 = vld [vmem:[#allocation11 + $0x40] sm:$0xff]
          %v526 = vld [vmem:[#allocation11 + $0x48] sm:$0xff]
          %v527 = vld [vmem:[#allocation11 + $0x50] sm:$0xff]
          %v528 = vld [vmem:[#allocation11 + $0x58] sm:$0xff]
          %v529 = vld [vmem:[#allocation11 + $0x60] sm:$0xff]
          %v530 = vld [vmem:[#allocation11 + $0x68] sm:$0xff]
          %v531 = vld [vmem:[#allocation11 + $0x70] sm:$0xff]
          %v532 = vld [vmem:[#allocation11 + $0x78] sm:$0xff]
          %v533 = vld [vmem:[%s6] sm:$0x1]
          %v535 = vperm.slane %v533, 0
          %537 = vmatpush.msra.mxu0 %v532
          %538 = vmatpush.msra.mxu0 %v531
          %539 = vmatpush.msra.mxu0 %v530
          %540 = vmatpush.msra.mxu0 %v529
          %541 = vmatpush.msra.mxu0 %v528
          %542 = vmatpush.msra.mxu0 %v527
          %543 = vmatpush.msra.mxu0 %v526
          %544 = vmatpush.msra.mxu0 %v525
          %545 = vmatpush.msra.mxu0 %v524
          %546 = vmatpush.msra.mxu0 %v523
          %547 = vmatpush.msra.mxu0 %v522
          %548 = vmatpush.msra.mxu0 %v521
          %549 = vmatpush.msra.mxu0 %v520
          %550 = vmatpush.msra.mxu0 %v519
          %551 = vmatpush.msra.mxu0 %v518
          %552 = vmatpush.msra.mxu0 %v517
          %553 = vmatmul.f32.gmra.mxu0 %v516
          %v554 = vpop.f32.mrf.mxu0
          %v555 = vadd.f32 %v535, %v554
          %556 = vdwg.mxu0
          %557 = vst [vmem:[%s384] sm:$0xff] %v555
        $region68: #{tpu_custom_call.1} parent=43 // pred_fallthru
          _
        %s558 = sand.u32 %s198, 1
        %s559 = scalar_lea.sflag [#allocation7], %s558
        %s560 = sand.u32 %s198, 1
        %s561 = smul.addr %s560, 8
        %s562 = scalar_lea.vmem [#allocation13], %s561
        // Predicated region
        $region69: #{tpu_custom_call.1} parent=43 // pred_check
          %p563 = pneg %p208
        $region70: #{tpu_custom_call.1} parent=43 // pred_check_branch
          %565 = sbr.rel (%p563) target = $region72
        $region71: #{tpu_custom_call.1} parent=43 // pred_region
          %567 = vsyncadd %s559, 0
          %s568 = smul.addr %s39, 8
          %s569 = scalar_lea.hbm %s7, %s568
          %s571 = sshll.u32 %s562, 4
          %s572 = int_to_ptr.vmem [resolvable:$true] %s571
          %s573 = sshll.u32 %s569, 4
          %s574 = int_to_ptr.hbm [resolvable:$true] %s573
          %576 = dma.vmem_to_hbm [thread:$0]  %s572, 128, %s574, %s559
        $region72: #{tpu_custom_call.1} parent=43 // pred_fallthru
          _
      $region44: #{tpu_custom_call.1} parent=5 // pred_fallthru
        _
      %p577 = scmp.le.s32.totalorder 2, %s29
      // Predicated region
      $region73: #{tpu_custom_call.1} parent=5 // pred_check
        %p578 = pneg %p577
      $region74: #{tpu_custom_call.1} parent=5 // pred_check_branch
        %580 = sbr.rel (%p578) target = $region76
      $region75: #{tpu_custom_call.1} parent=5 // pred_region
        %s581 = ssub.s32 %s29, 2
        // Predicated region
        $region77: #{tpu_custom_call.1} parent=75 // pred_check
          %p582 = pneg %p214
        $region78: #{tpu_custom_call.1} parent=75 // pred_check_branch
          %584 = sbr.rel (%p582) target = $region80
        $region79: #{tpu_custom_call.1} parent=75 // pred_region
          %s585 = sand.u32 %s199, 1
          %s586 = scalar_lea.sflag [#allocation7], %s585
          %s587 = sand.u32 %s199, 1
          %s588 = smul.addr %s587, 8
          %s589 = scalar_lea.vmem [#allocation13], %s588
          %591 = dma.done %s586, 128
        $region80: #{tpu_custom_call.1} parent=75 // pred_fallthru
          _
      $region76: #{tpu_custom_call.1} parent=5 // pred_fallthru
        _
    $region6: #{tpu_custom_call.1} parent=1 // loop_footer
      %s33 = sadd.s32 1, %s29
    $region7: #{tpu_custom_call.1} parent=1 // loop_footer_branch
      %28 = sbr.rel target = $region3
    $region8: #{tpu_custom_call.1} parent=1 // loop_exit
      _
    %592 = vsyncpa [#allocation6], 1
    %s593 = scalar_lea.sflag [#allocation6], 1
    %594 = vsyncpa %s593, 1
    %595 = vsyncpa [#allocation9], 1
    %596 = vsyncpa [#allocation12], 1
    %597 = vsyncpa [#allocation7], 1
    %s598 = scalar_lea.sflag [#allocation7], 1
    %599 = vsyncpa %s598, 1

</llo_original>
